<compile_context>
chip_gen: v5e
topology: v5e:2x2
jax: 0.10.0
libtpu: 0.0.40
codegen_flags: <defaults>
</compile_context>

<pallas_src>
import functools

import jax
import jax.numpy as jnp
from jax.experimental import pallas as pl
from jax.experimental.pallas import tpu as pltpu

LANE = 128


def _round_up(n, m):
    return ((n + m - 1) // m) * m


def _layout(H, U0, U1):
    """Row offsets of each parameter segment inside the packed [rows, 128] slab."""
    r_w0 = 0                                  # [H,  128]  (w0 in [:H, :U0])
    r_b0 = _round_up(r_w0 + H, 8)             # [1,  128]
    r_w1 = _round_up(r_b0 + 1, 8)             # [U0, 128]  (w1 in [:U0, :U1])
    r_b1 = _round_up(r_w1 + U0, 8)            # [1,  128]
    r_wf = _round_up(r_b1 + 1, 8)             # [U1, 128]  (wf in [:U1, :C])
    r_bf = _round_up(r_wf + U1, 8)            # [1,  128]  (pad lanes = -1e30)
    rows = _round_up(r_bf + 1, 8)
    return (r_w0, r_b0, r_w1, r_b1, r_wf, r_bf), rows


def _actor_kernel(x_ref, p_ref, u_ref, probs_ref, dec_ref, *, H, U0, U1, offs):
    """Fused MLP + softmax + exponential-race categorical sample (per batch tile)."""
    r_w0, r_b0, r_w1, r_b1, r_wf, r_bf = offs
    x = x_ref[...].astype(jnp.float32)                       # [tb, H]

    # Static views into the single packed parameter slab (one DMA, grid-invariant).
    w0 = p_ref[r_w0:r_w0 + H, :].astype(jnp.float32)          # [H,  128]
    b0 = p_ref[r_b0:r_b0 + 1, :].astype(jnp.float32)          # [1,  128]
    w1 = p_ref[r_w1:r_w1 + U0, :].astype(jnp.float32)         # [U0, 128]
    b1 = p_ref[r_b1:r_b1 + 1, :].astype(jnp.float32)          # [1,  128]
    wf = p_ref[r_wf:r_wf + U1, :].astype(jnp.float32)         # [U1, 128]
    bf = p_ref[r_bf:r_bf + 1, :].astype(jnp.float32)          # [1,  128] pad=-1e30

    # linear_0 + ReLU, linear_1 + Tanh, final_linear (lane-padded; pads stay 0).
    h0 = jnp.maximum(
        jnp.dot(x, w0, preferred_element_type=jnp.float32) + b0, 0.0)
    h1 = jnp.tanh(
        jnp.dot(h0[:, :U0], w1, preferred_element_type=jnp.float32) + b1)
    logits = jnp.dot(h1[:, :U1], wf,
                     preferred_element_type=jnp.float32) + bf            # [tb,128]

    # softmax over the lane axis; padded lanes carry -1e30 -> exp -> 0.
    m = jnp.max(logits, axis=-1, keepdims=True)
    e = jnp.exp(logits - m)
    denom = jnp.sum(e, axis=-1, keepdims=True)
    probs_ref[...] = e / denom                                # exact divide

    # Fused torch.multinomial(probs, 1): exponential race argmax_i e_i / E_i
    # with E_i = -log(u_i) ~ Exp(1).  Padded lanes have e == 0 -> never win.
    u = jnp.maximum(u_ref[...], jnp.float32(1e-20))           # keep log finite
    scores = e / (-jnp.log(u))                                # [tb, 128]
    best = jnp.max(scores, axis=-1, keepdims=True)
    lane_idx = jax.lax.broadcasted_iota(jnp.int32, scores.shape, 1)
    dec = jnp.min(jnp.where(scores >= best, lane_idx, LANE),
                  axis=-1, keepdims=True)                     # [tb, 1] int32
    dec_ref[...] = dec.astype(jnp.int32)


def make_insert_actor(encoder_hidden_size, units0, units1, num_candidates,
                      param_dtype=jnp.float32, batch_tile=512):
    """Returns (pack_params, forward) for fixed layer sizes.

    param_dtype: jnp.float32 (safe everywhere, required on v5e) or jnp.bfloat16
      (halves the param-slab DMA on v6e/v7x; compute stays f32).
    batch_tile: rows per grid step (multiple of 8); large batches are sharded
      across the grid ("parallel" -> both v7x TensorCores).
    """
    assert batch_tile % 8 == 0
    H, U0, U1, C = encoder_hidden_size, units0, units1, num_candidates
    offs, rows = _layout(H, U0, U1)
    r_w0, r_b0, r_w1, r_b1, r_wf, r_bf = offs

    def pack_params(w0, b0, w1, b1, wf, bf):
        """Pack all weights/biases into one lane-padded slab (done once)."""
        p = jnp.zeros((rows, LANE), param_dtype)
        p = p.at[r_w0:r_w0 + H, :U0].set(w0.astype(param_dtype))
        p = p.at[r_b0, :U0].set(b0.reshape(-1).astype(param_dtype))
        p = p.at[r_w1:r_w1 + U0, :U1].set(w1.astype(param_dtype))
        p = p.at[r_b1, :U1].set(b1.reshape(-1).astype(param_dtype))
        p = p.at[r_wf:r_wf + U1, :C].set(wf.astype(param_dtype))
        bf_row = jnp.full((LANE,), -1e30, param_dtype)
        bf_row = bf_row.at[:C].set(bf.reshape(-1).astype(param_dtype))
        p = p.at[r_bf, :].set(bf_row)
        return p

    kernel = functools.partial(_actor_kernel, H=H, U0=U0, U1=U1, offs=offs)

    @jax.jit
    def forward(state, packed_params, key):
        """InsertActor.forward: returns (compute_decisions [B] i32, probs [B,C]).

        `key` must be a fresh jax.random key per call (drives the sample).
        No host sync here; the caller reads decisions[0] when it needs it.
        """
        B = state.shape[0]
        tile_b = min(batch_tile, _round_up(B, 8))
        B_pad = _round_up(B, tile_b)
        grid = (B_pad // tile_b,)

        x = jnp.zeros((B_pad, H), jnp.float32).at[:B].set(
            state.astype(jnp.float32))
        u = jax.random.uniform(key, (B_pad, LANE), jnp.float32)

        cost = pl.CostEstimate(
            flops=int(2 * B_pad * LANE * (H + U0 + U1)),
            transcendentals=int(3 * B_pad * LANE),
            bytes_accessed=int(4 * (x.size + u.size + B_pad * (LANE + 1))
                               + packed_params.size * packed_params.dtype.itemsize),
        )
        probs_pad, dec_pad = pl.pallas_call(
            kernel,
            out_shape=(jax.ShapeDtypeStruct((B_pad, LANE), jnp.float32),
                       jax.ShapeDtypeStruct((B_pad, 1), jnp.int32)),
            grid=grid,
            in_specs=[
                pl.BlockSpec((tile_b, H), lambda i: (i, 0)),      # state tile
                pl.BlockSpec((rows, LANE), lambda i: (0, 0)),     # params (resident)
                pl.BlockSpec((tile_b, LANE), lambda i: (i, 0)),   # uniform noise
            ],
            out_specs=(
                pl.BlockSpec((tile_b, LANE), lambda i: (i, 0)),   # probs (lane-dense)
                pl.BlockSpec((tile_b, 1), lambda i: (i, 0)),      # decisions (int32)
            ),
            compiler_params=pltpu.CompilerParams(
                dimension_semantics=("parallel",)),
            cost_estimate=cost,
        )(x, packed_params, u)

        compute_probs = probs_pad[:B, :C]          # [B, C]
        compute_decisions = dec_pad[:B, 0]         # [B] int32
        return compute_decisions, compute_probs

    return pack_params, forward


def init_params(key, hidden, units0, units1, num_candidates):
    """init_linear_seq(scheme={'type':'uniform'}): weights ~ U(-0.1, 0.1), biases 0."""
    k0, k1, k2 = jax.random.split(key, 3)
    w0 = jax.random.uniform(k0, (hidden, units0), jnp.float32, -0.1, 0.1)
    b0 = jnp.zeros((1, units0), jnp.float32)
    w1 = jax.random.uniform(k1, (units0, units1), jnp.float32, -0.1, 0.1)
    b1 = jnp.zeros((1, units1), jnp.float32)
    wf = jax.random.uniform(k2, (units1, num_candidates), jnp.float32, -0.1, 0.1)
    bf = jnp.zeros((1, num_candidates), jnp.float32)
    return (w0, b0, w1, b1, wf, bf)


def _ref_probs(state, w0, b0, w1, b1, wf, bf):
    """Pure-JAX reference of compute_decider + softmax."""
    h0 = jnp.maximum(state @ w0 + b0, 0.0)
    h1 = jnp.tanh(h0 @ w1 + b1)
    logits = h1 @ wf + bf
    return jax.nn.softmax(logits, axis=-1)


if __name__ == "__main__":
    # Shapes consistent with the module: encoder_hidden_size=32, two hidden
    # layers (relu 64, tanh 32), 8 compute candidates, batch=2.
    batch = 2
    encoder_hidden_size = 32
    num_candidates = 8
    units0, units1 = 64, 32

    key = jax.random.PRNGKey(0)
    key_params, key_state, key_sample = jax.random.split(key, 3)

    params = init_params(key_params, encoder_hidden_size, units0, units1,
                         num_candidates)
    state = jax.random.normal(key_state, (batch, encoder_hidden_size),
                              jnp.float32)

    pack_params, forward = make_insert_actor(
        encoder_hidden_size, units0, units1, num_candidates)
    packed = pack_params(*params)

    decisions, probs = forward(state, packed, key_sample)
    probs = jax.block_until_ready(probs)
    decisions = jax.block_until_ready(decisions)

    # Correctness checks (test harness only; forward itself never syncs to host).
    assert probs.shape == (batch, num_candidates)
    assert decisions.shape == (batch,)
    ref = _ref_probs(state, *params)
    assert jnp.allclose(probs, ref, atol=2e-3), "probs mismatch vs JAX reference"
    row_sums = jnp.sum(probs, axis=-1)
    assert jnp.allclose(row_sums, jnp.ones_like(row_sums), atol=2e-3)
    assert bool(jnp.all((decisions >= 0) & (decisions < num_candidates)))
    # The PyTorch module returns decisions.data.numpy()[0, 0]; that is decisions[0].

    print("KERNEL_OK")
</pallas_src>

<mosaic_0001>
module attributes {stable_mosaic.version = 11 : i64} {
  func.func @_actor_kernel(%arg0: i32, %arg1: memref<8x32xf32, #tpu.memory_space<vmem>>, %arg2: memref<152x128xf32, #tpu.memory_space<vmem>>, %arg3: memref<8x128xf32, #tpu.memory_space<vmem>>, %arg4: memref<8x128xf32, #tpu.memory_space<vmem>>, %arg5: memref<8x1xi32, #tpu.memory_space<vmem>>) attributes {dimension_semantics = [#tpu.dimension_semantics<parallel>], iteration_bounds = array<i64: 1>, scalar_prefetch = 0 : i64, scratch_operands = 0 : i64, tpu.core_type = #tpu.core_type<tc>, window_params = [{transform_indices = @transform_0, window_bounds = array<i64: 8, 32>}, {pipeline_mode = #tpu.pipeline_mode<synchronous>, transform_indices = @transform_1, window_bounds = array<i64: 152, 128>}, {transform_indices = @transform_2, window_bounds = array<i64: 8, 128>}, {transform_indices = @transform_3, window_bounds = array<i64: 8, 128>}, {transform_indices = @transform_4, window_bounds = array<i64: 8, 1>}]} {
    %c0 = arith.constant 0 : index
    %c0_0 = arith.constant 0 : index
    %0 = vector.load %arg1[%c0, %c0_0] : memref<8x32xf32, #tpu.memory_space<vmem>>, vector<8x32xf32>
    %c0_1 = arith.constant 0 : index
    %c0_2 = arith.constant 0 : index
    %1 = vector.load %arg2[%c0_1, %c0_2] : memref<152x128xf32, #tpu.memory_space<vmem>>, vector<32x128xf32>
    %c32 = arith.constant 32 : index
    %c0_3 = arith.constant 0 : index
    %2 = vector.load %arg2[%c32, %c0_3] : memref<152x128xf32, #tpu.memory_space<vmem>>, vector<1x128xf32>
    %c40 = arith.constant 40 : index
    %c0_4 = arith.constant 0 : index
    %3 = vector.load %arg2[%c40, %c0_4] : memref<152x128xf32, #tpu.memory_space<vmem>>, vector<64x128xf32>
    %c104 = arith.constant 104 : index
    %c0_5 = arith.constant 0 : index
    %4 = vector.load %arg2[%c104, %c0_5] : memref<152x128xf32, #tpu.memory_space<vmem>>, vector<1x128xf32>
    %c112 = arith.constant 112 : index
    %c0_6 = arith.constant 0 : index
    %5 = vector.load %arg2[%c112, %c0_6] : memref<152x128xf32, #tpu.memory_space<vmem>>, vector<32x128xf32>
    %c144 = arith.constant 144 : index
    %c0_7 = arith.constant 0 : index
    %6 = vector.load %arg2[%c144, %c0_7] : memref<152x128xf32, #tpu.memory_space<vmem>>, vector<1x128xf32>
    %cst = arith.constant dense<0.000000e+00> : vector<8x128xf32>
    %7 = tpu.matmul %0, %1, %cst {dimension_numbers = #tpu.dot_dimension_numbers<[1], [0], [0], [1], [0, 0, 1, 1], [], []>} : vector<8x32xf32>, vector<32x128xf32>, vector<8x128xf32> -> vector<8x128xf32>
    %8 = vector.broadcast %2 : vector<1x128xf32> to vector<8x128xf32>
    %9 = arith.addf %7, %8 : vector<8x128xf32>
    %cst_8 = arith.constant 0.000000e+00 : f32
    %10 = vector.broadcast %cst_8 : f32 to vector<8x128xf32>
    %11 = arith.maximumf %9, %10 : vector<8x128xf32>
    %12 = vector.extract_strided_slice %11 {offsets = [0, 0], sizes = [8, 64], strides = [1, 1]} : vector<8x128xf32> to vector<8x64xf32>
    %cst_9 = arith.constant dense<0.000000e+00> : vector<8x128xf32>
    %13 = tpu.matmul %12, %3, %cst_9 {dimension_numbers = #tpu.dot_dimension_numbers<[1], [0], [0], [1], [0, 0, 1, 1], [], []>} : vector<8x64xf32>, vector<64x128xf32>, vector<8x128xf32> -> vector<8x128xf32>
    %14 = vector.broadcast %4 : vector<1x128xf32> to vector<8x128xf32>
    %15 = arith.addf %13, %14 : vector<8x128xf32>
    %16 = math.tanh %15 : vector<8x128xf32>
    %17 = vector.extract_strided_slice %16 {offsets = [0, 0], sizes = [8, 32], strides = [1, 1]} : vector<8x128xf32> to vector<8x32xf32>
    %cst_10 = arith.constant dense<0.000000e+00> : vector<8x128xf32>
    %18 = tpu.matmul %17, %5, %cst_10 {dimension_numbers = #tpu.dot_dimension_numbers<[1], [0], [0], [1], [0, 0, 1, 1], [], []>} : vector<8x32xf32>, vector<32x128xf32>, vector<8x128xf32> -> vector<8x128xf32>
    %19 = vector.broadcast %6 : vector<1x128xf32> to vector<8x128xf32>
    %20 = arith.addf %18, %19 : vector<8x128xf32>
    %cst_11 = arith.constant dense<0xFF800000> : vector<8xf32>
    %21 = vector.multi_reduction <maximumf>, %20, %cst_11 [1] : vector<8x128xf32> to vector<8xf32>
    %22 = vector.shape_cast %21 : vector<8xf32> to vector<8x1xf32>
    %23 = vector.broadcast %22 : vector<8x1xf32> to vector<8x128xf32>
    %24 = arith.subf %20, %23 : vector<8x128xf32>
    %25 = math.exp %24 : vector<8x128xf32>
    %cst_12 = arith.constant dense<0.000000e+00> : vector<8xf32>
    %26 = vector.multi_reduction <add>, %25, %cst_12 [1] : vector<8x128xf32> to vector<8xf32>
    %27 = vector.shape_cast %26 : vector<8xf32> to vector<8x1xf32>
    %28 = vector.broadcast %27 : vector<8x1xf32> to vector<8x128xf32>
    %29 = arith.divf %25, %28 : vector<8x128xf32>
    %c0_13 = arith.constant 0 : index
    %c0_14 = arith.constant 0 : index
    %30 = vector.load %arg4[%c0_13, %c0_14] : memref<8x128xf32, #tpu.memory_space<vmem>>, vector<8x128xf32>
    tpu.vector_store %arg4[%c0_13, %c0_14], %29 {strides = array<i32>} : memref<8x128xf32, #tpu.memory_space<vmem>>, vector<8x128xf32>,
    %c0_15 = arith.constant 0 : index
    %c0_16 = arith.constant 0 : index
    %31 = vector.load %arg3[%c0_15, %c0_16] : memref<8x128xf32, #tpu.memory_space<vmem>>, vector<8x128xf32>
    %cst_17 = arith.constant 9.99999968E-21 : f32
    %32 = vector.broadcast %cst_17 : f32 to vector<8x128xf32>
    %33 = arith.maximumf %31, %32 : vector<8x128xf32>
    %34 = math.log %33 : vector<8x128xf32>
    %cst_18 = arith.constant 0.000000e+00 : f32
    %35 = vector.broadcast %cst_18 : f32 to vector<8x128xf32>
    %36 = arith.subf %35, %34 : vector<8x128xf32>
    %37 = arith.divf %25, %36 : vector<8x128xf32>
    %cst_19 = arith.constant dense<0xFF800000> : vector<8xf32>
    %38 = vector.multi_reduction <maximumf>, %37, %cst_19 [1] : vector<8x128xf32> to vector<8xf32>
    %39 = vector.shape_cast %38 : vector<8xf32> to vector<8x1xf32>
    %40 = tpu.iota {dimensions = array<i32: 1>} : vector<8x128xi32>
    %41 = vector.broadcast %39 : vector<8x1xf32> to vector<8x128xf32>
    %42 = arith.cmpf oge, %37, %41 : vector<8x128xf32>
    %c128_i32 = arith.constant 128 : i32
    %43 = vector.broadcast %c128_i32 : i32 to vector<8x128xi32>
    %44 = arith.select %42, %40, %43 : vector<8x128xi1>, vector<8x128xi32>
    %cst_20 = arith.constant dense<2147483647> : vector<8xi32>
    %45 = vector.multi_reduction <minsi>, %44, %cst_20 [1] : vector<8x128xi32> to vector<8xi32>
    %46 = vector.shape_cast %45 : vector<8xi32> to vector<8x1xi32>
    %c0_21 = arith.constant 0 : index
    %c0_22 = arith.constant 0 : index
    %47 = vector.load %arg5[%c0_21, %c0_22] : memref<8x1xi32, #tpu.memory_space<vmem>>, vector<8x1xi32>
    tpu.vector_store %arg5[%c0_21, %c0_22], %46 {strides = array<i32>} : memref<8x1xi32, #tpu.memory_space<vmem>>, vector<8x1xi32>,
    return
  }
  func.func @transform_0(%arg0: i32) -> (i32, i32) {
    %c0_i32 = arith.constant 0 : i32
    %c0_i32_0 = arith.constant 0 : i32
    return %arg0, %c0_i32 : i32, i32
  }
  func.func @transform_1(%arg0: i32) -> (i32, i32) {
    %c0_i32 = arith.constant 0 : i32
    %c0_i32_0 = arith.constant 0 : i32
    %c0_i32_1 = arith.constant 0 : i32
    return %c0_i32, %c0_i32_0 : i32, i32
  }
  func.func @transform_2(%arg0: i32) -> (i32, i32) {
    %c0_i32 = arith.constant 0 : i32
    %c0_i32_0 = arith.constant 0 : i32
    return %arg0, %c0_i32 : i32, i32
  }
  func.func @transform_3(%arg0: i32) -> (i32, i32) {
    %c0_i32 = arith.constant 0 : i32
    %c0_i32_0 = arith.constant 0 : i32
    return %arg0, %c0_i32 : i32, i32
  }
  func.func @transform_4(%arg0: i32) -> (i32, i32) {
    %c0_i32 = arith.constant 0 : i32
    %c0_i32_0 = arith.constant 0 : i32
    return %arg0, %c0_i32 : i32, i32
  }
}

</mosaic_0001>

<llo_original>
// kernel: forward.1
$region0: #{forward.1}
  #allocation0 [shape = 'u32[]', space=smem, size = 0x4, offset = 0x4, fixed_abs, tag = 'smem constant byte address 0x4 - core index']
  #allocation1 [shape = 'u32[72,128]{1,0:T(1,128)}', space=vmem, size = 0x9000, scoped, tag = 'internal scratch']
  %s0 = inlined_call_operand.vmem [shape: f32[8,32], index: 0, kind: input, shape index: {}]
  %s1 = inlined_call_operand.hbm [shape: f32[152,128], index: 1, kind: input, shape index: {}]
  %s2 = inlined_call_operand.vmem [shape: f32[8,128], index: 2, kind: input, shape index: {}]
  %s3 = inlined_call_operand.vmem [shape: f32[8,128], index: 3, kind: output, shape index: {0}]
  %s4 = inlined_call_operand.vmem [shape: s32[8,1], index: 4, kind: output, shape index: {1}]
  %5 = xla_tuple %s3, %s4
  %s6 = sld [smem:[#allocation0]]
  $region34: #{forward.1} parent=0
    _
  %s8 = ssub.s32 1, %s6
  %s9 = scalar_select 0, %s8, %s6
  $region1: #{forward.1} parent=0
    #allocation2 [shape = 'u8[77824]{0}', space=vmem, size = 0x13000, scoped, tag = 'input window, operand 1, single buffered']
    #allocation3 [shape = 's32[1]{0}', space=sflag, size = 0x4, scoped, tag = 'scoped memory for forward.1']
    %10 = vsyncpa [#allocation3], 0
    // Predicated region
    $region2: #{forward.1} parent=1 // pred_check
      _
    $region3: #{forward.1} parent=1 // pred_check_branch
      %12 = sbr.rel (0) target = $region5
    $region4: #{forward.1} parent=1 // pred_region
      _
    $region5: #{forward.1} parent=1 // pred_fallthru
      _
    // Predicated region
    $region6: #{forward.1} parent=1 // pred_check
      _
    $region7: #{forward.1} parent=1 // pred_check_branch
      %14 = sbr.rel (0) target = $region9
    $region8: #{forward.1} parent=1 // pred_region
      %16 = vsyncadd [#allocation3], 0
      %s17 = sshll.u32 %s1, 4
      %s18 = int_to_ptr.hbm [resolvable:$true] %s17
      %s19 = sshll.u32 [#allocation2], 4
      %s20 = int_to_ptr.vmem [resolvable:$true] %s19
      %25 = dma.hbm_to_vmem [thread:$0]  %s18, 2432, %s20, [#allocation3], 128, 128, 8
    $region9: #{forward.1} parent=1 // pred_fallthru
      _
    // Predicated region
    $region10: #{forward.1} parent=1 // pred_check
      _
    $region11: #{forward.1} parent=1 // pred_check_branch
      %27 = sbr.rel (0) target = $region13
    $region12: #{forward.1} parent=1 // pred_region
      _
    $region13: #{forward.1} parent=1 // pred_fallthru
      _
    // Predicated region
    $region14: #{forward.1} parent=1 // pred_check
      _
    $region15: #{forward.1} parent=1 // pred_check_branch
      %29 = sbr.rel (0) target = $region17
    $region16: #{forward.1} parent=1 // pred_region
      %31 = dma.done [#allocation3], 2432
    $region17: #{forward.1} parent=1 // pred_fallthru
      _
    %v32 = vld [vmem:[%s0] sm:$0xff]
    %v33 = vld [vmem:[#allocation2] sm:$0xff]
    %v34 = vld [vmem:[#allocation2 + $0x8] sm:$0xff]
    %v35 = vld [vmem:[#allocation2 + $0x10] sm:$0xff]
    %v36 = vld [vmem:[#allocation2 + $0x18] sm:$0xff]
    %v37 = vld [vmem:[#allocation2 + $0x20] sm:$0x1]
    %v38 = vld [vmem:[#allocation2 + $0x28] sm:$0xff]
    %v39 = vld [vmem:[#allocation2 + $0x30] sm:$0xff]
    %v40 = vld [vmem:[#allocation2 + $0x38] sm:$0xff]
    %v41 = vld [vmem:[#allocation2 + $0x40] sm:$0xff]
    %v42 = vld [vmem:[#allocation2 + $0x48] sm:$0xff]
    %v43 = vld [vmem:[#allocation2 + $0x50] sm:$0xff]
    %v44 = vld [vmem:[#allocation2 + $0x58] sm:$0xff]
    %v45 = vld [vmem:[#allocation2 + $0x60] sm:$0xff]
    %v46 = vld [vmem:[#allocation2 + $0x68] sm:$0x1]
    %v47 = vld [vmem:[#allocation2 + $0x70] sm:$0xff]
    %v48 = vld [vmem:[#allocation2 + $0x78] sm:$0xff]
    %v49 = vld [vmem:[#allocation2 + $0x80] sm:$0xff]
    %v50 = vld [vmem:[#allocation2 + $0x88] sm:$0xff]
    %v51 = vld [vmem:[#allocation2 + $0x90] sm:$0x1]
    %v52 = vperm.slane %v37, 0
    %vm53 = vcmask 261120
    %v55 = vsel %vm53, %v32, 0
    %57 = vmatpush.msra.mxu0 0.0
    %58 = vmatpush.msra.mxu0 0.0
    %59 = vmatpush.msra.mxu0 0.0
    %60 = vmatpush.msra.mxu0 0.0
    %61 = vmatpush.msra.mxu0 0.0
    %62 = vmatpush.msra.mxu0 0.0
    %63 = vmatpush.msra.mxu0 0.0
    %64 = vmatpush.msra.mxu0 0.0
    %65 = vmatpush.msra.mxu0 0.0
    %66 = vmatpush.msra.mxu0 0.0
    %67 = vmatpush.msra.mxu0 0.0
    %68 = vmatpush.msra.mxu0 0.0
    %69 = vmatpush.msra.mxu0 %v36
    %70 = vmatpush.msra.mxu0 %v35
    %71 = vmatpush.msra.mxu0 %v34
    %72 = vmatpush.msra.mxu0 %v33
    %73 = vmatmul.f32.gmra.mxu0 %v55
    %v74 = vpop.f32.mrf.mxu0
    %v75 = vadd.f32 %v52, %v74
    %76 = vdwg.mxu0
    %v77 = vmax.f32 %v75, 0.0
    %v78 = vperm.slane %v46, 0
    %vm79 = vcmask 523264
    %v81 = vsel %vm79, %v77, 0
    %83 = vmatpush.msra.mxu0 0.0
    %84 = vmatpush.msra.mxu0 0.0
    %85 = vmatpush.msra.mxu0 0.0
    %86 = vmatpush.msra.mxu0 0.0
    %87 = vmatpush.msra.mxu0 0.0
    %88 = vmatpush.msra.mxu0 0.0
    %89 = vmatpush.msra.mxu0 0.0
    %90 = vmatpush.msra.mxu0 0.0
    %91 = vmatpush.msra.mxu0 %v45
    %92 = vmatpush.msra.mxu0 %v44
    %93 = vmatpush.msra.mxu0 %v43
    %94 = vmatpush.msra.mxu0 %v42
    %95 = vmatpush.msra.mxu0 %v41
    %96 = vmatpush.msra.mxu0 %v40
    %97 = vmatpush.msra.mxu0 %v39
    %98 = vmatpush.msra.mxu0 %v38
    %99 = vmatmul.f32.gmra.mxu0 %v81
    %v100 = vpop.f32.mrf.mxu0
    %v101 = vadd.f32 %v78, %v100
    %102 = vdwg.mxu0
    %v103 = vtanh.pop %v101
    %v104 = vperm.slane %v51, 0
    %v106 = vsel %vm53, %v103, 0
    %108 = vmatpush.msra.mxu0 0.0
    %109 = vmatpush.msra.mxu0 0.0
    %110 = vmatpush.msra.mxu0 0.0
    %111 = vmatpush.msra.mxu0 0.0
    %112 = vmatpush.msra.mxu0 0.0
    %113 = vmatpush.msra.mxu0 0.0
    %114 = vmatpush.msra.mxu0 0.0
    %115 = vmatpush.msra.mxu0 0.0
    %116 = vmatpush.msra.mxu0 0.0
    %117 = vmatpush.msra.mxu0 0.0
    %118 = vmatpush.msra.mxu0 0.0
    %119 = vmatpush.msra.mxu0 0.0
    %120 = vmatpush.msra.mxu0 %v50
    %121 = vmatpush.msra.mxu0 %v49
    %122 = vmatpush.msra.mxu0 %v48
    %123 = vmatpush.msra.mxu0 %v47
    %124 = vmatmul.f32.gmra.mxu0 %v106
    %v125 = vpop.f32.mrf.mxu0
    %v126 = vadd.f32 %v104, %v125
    %127 = vdwg.mxu0
    %128 = vmax.xlane.f32.xlu0 %v126
    %v129 = vpop.xlane.xlu0 %128
    %v130 = vsub.f32 %v126, %v129
    %v131 = vmul.f32 %v130, 1.442695
    %v132 = vpow.pop %v131
    %133 = vadd.xlane.f32.xlu0 %v132
    %v134 = vpop.xlane.xlu0 %133
    %v135 = vrcp.pop %v134
    %v136 = vmul.f32 %v134, %v135
    %v137 = vsub.f32 1.0, %v136
    %v138 = vmul.f32 %v135, %v137
    %v139 = vadd.f32 %v135, %v138
    %vm140 = vweird.f32 %v134
    %vm141 = vweird.f32 %v135
    %vm142 = vmor %vm140, %vm141
    %v143 = vsel %vm142, %v135, %v139
    %v144 = vand.u32 2147483647, %v134
    %vm145 = vcmp.eq.f32.partialorder %v144, 8.507059e+37
    %v146 = vand.u32 %v134, 2147483648
    %v147 = vor.u32 1.1754944e-38, %v146
    %v148 = vsel %vm145, %v147, %v143
    %v149 = vmul.f32 %v132, %v148
    %150 = vst [vmem:[%s3] sm:$0xff] %v149
    %v151 = vld [vmem:[%s2] sm:$0xff]
    %v152 = vmax.f32 %v151, 1e-20
    %v153 = vlog2.pop %v152
    %v154 = vmul.f32 %v153, 0.6931472
    %v155 = vsub.f32 0.0, %v154
    %v156 = vrcp.pop %v155
    %v157 = vmul.f32 %v155, %v156
    %v158 = vsub.f32 1.0, %v157
    %v159 = vmul.f32 %v156, %v158
    %v160 = vadd.f32 %v156, %v159
    %vm161 = vweird.f32 %v155
    %vm162 = vweird.f32 %v156
    %vm163 = vmor %vm161, %vm162
    %v164 = vsel %vm163, %v156, %v160
    %v165 = vand.u32 2147483647, %v155
    %vm166 = vcmp.eq.f32.partialorder %v165, 8.507059e+37
    %v167 = vand.u32 %v155, 2147483648
    %v168 = vor.u32 1.1754944e-38, %v167
    %v169 = vsel %vm166, %v168, %v164
    %v170 = vmul.f32 %v132, %v169
    %171 = vmax.xlane.f32.xlu0 %v170
    %v172 = vpop.xlane.xlu0 %171
    %v173 = vlaneseq
    %v174 = vand.u32 %v173, 127
    %vm175 = vcmp.ge.f32.partialorder %v170, %v172
    %v176 = vsel %vm175, %v174, 128
    %v177 = vand.u32 %v176, 65535
    %v178 = vshra.s32 %v176, 16
    %v179 = vcvt.s32.f32 %v177
    %v180 = vcvt.s32.f32 %v178
    %181 = vmin.xlane.f32.xlu0 %v180
    %v182 = vpop.xlane.xlu0 %181
    %vm183 = vcmp.eq.f32.partialorder %v180, %v182
    %v184 = vsel %vm183, %v179, inf
    %185 = vmin.xlane.f32.xlu0 %v184
    %v186 = vpop.xlane.xlu0 %185
    %v187 = vcvt.f32.s32 %v186
    %v188 = vcvt.f32.s32 %v182
    %v189 = vshll.u32 %v188, 16
    %v190 = vadd.s32 %v189, %v187
    %vm191 = vcmask 7168
    %192 = vst.msk [vmem:[%s4] sm:$0xff] %vm191, %v190
    // Predicated region
    $region18: #{forward.1} parent=1 // pred_check
      _
    $region19: #{forward.1} parent=1 // pred_check_branch
      %194 = sbr.rel (0) target = $region21
    $region20: #{forward.1} parent=1 // pred_region
      _
    $region21: #{forward.1} parent=1 // pred_fallthru
      _
    // Predicated region
    $region22: #{forward.1} parent=1 // pred_check
      _
    $region23: #{forward.1} parent=1 // pred_check_branch
      %196 = sbr.rel (0) target = $region25
    $region24: #{forward.1} parent=1 // pred_region
      _
    $region25: #{forward.1} parent=1 // pred_fallthru
      _
    // Predicated region
    $region26: #{forward.1} parent=1 // pred_check
      _
    $region27: #{forward.1} parent=1 // pred_check_branch
      %198 = sbr.rel (0) target = $region29
    $region28: #{forward.1} parent=1 // pred_region
      _
    $region29: #{forward.1} parent=1 // pred_fallthru
      _
    // Predicated region
    $region30: #{forward.1} parent=1 // pred_check
      _
    $region31: #{forward.1} parent=1 // pred_check_branch
      %200 = sbr.rel (0) target = $region33
    $region32: #{forward.1} parent=1 // pred_region
      _
    $region33: #{forward.1} parent=1 // pred_fallthru
      _
    %201 = vsyncpa [#allocation3], 1

</llo_original>
